<compile_context>
chip_gen: v7x
topology: tpu7x:2x2x1
jax: 0.10.0
libtpu: 0.0.40
codegen_flags: <defaults>
</compile_context>

<pallas_src>
import math

import jax
import jax.numpy as jnp
from jax.experimental import pallas as pl
from jax.experimental.pallas import tpu as pltpu


_VPU_IC_MAX = 8                    # contraction dims this small skip the MXU
_VMEM_TILE_BUDGET = 12 * 1024 * 1024


def _round_up(x, m):
    return ((x + m - 1) // m) * m


def _mac(x, wt, b):
    """VPU path: y[m, d] = b[0, d] + sum_c x[m, c] * wt[c, d].

    x: [TM, C], wt: [C, D], b: [1, D], all f32.  Unrolled at trace time
    (C <= _VPU_IC_MAX) into C broadcast-multiply-adds on the VALU.
    """
    tm, c_dim = x.shape
    acc = jnp.broadcast_to(b, (tm, wt.shape[1]))
    for c in range(c_dim):
        acc = acc + x[:, c:c + 1] * wt[c:c + 1, :]
    return acc


def _ftn_kernel(x_ref, w1t_ref, b1_ref, w2t_ref, b2_ref, o_ref):
    """x: [TM, IC] activations (TM = TOC*KKp, rows ordered (oc, p));
    w1t/w2t: [IC, IC] f32 (right-multiply form); b1/b2: [1, IC] f32;
    o: [TOC, IC, KK] f32 (NCHW block).  Computes
        y = relu(x @ w1t + b1) @ w2t + b2
    and re-tiles it to the NCHW output block (no wrapper transpose needed)."""
    toc, ic, kk = o_ref.shape
    tm = x_ref.shape[0]
    kk_pad = tm // toc

    x = x_ref[...].astype(jnp.float32)        # bf16 slab -> f32 math
    w1t = w1t_ref[...]
    w2t = w2t_ref[...]
    b1 = b1_ref[...]
    b2 = b2_ref[...]

    if ic <= _VPU_IC_MAX:
        # Tiny contraction dim: unrolled VALU broadcast-MACs, all f32
        # (avoids bf16 elementwise on v5e and an MXU at <2% utilization).
        h = jnp.maximum(_mac(x, w1t, b1), 0.0)
        y = _mac(h, w2t, b2)
    else:
        h = jnp.dot(x, w1t, preferred_element_type=jnp.float32) + b1
        h = jnp.maximum(h, 0.0)               # bias + ReLU in f32
        y = jnp.dot(h, w2t, preferred_element_type=jnp.float32) + b2

    # Re-tile [TOC*KKp, IC] -> [TOC, IC, KK] (NCHW block):
    #   * pad IC up to a multiple of 8 only when tiny (keeps the transpose
    #     operands sublane-aligned),
    #   * split the row dim (tile-aligned: KKp % 8 == 0),
    #   * batched minor-dims transpose, then drop the row/lane padding.
    ic_pad = _round_up(ic, 8)
    if ic_pad != ic:
        y = jnp.pad(y, ((0, 0), (0, ic_pad - ic)))
    y3 = y.reshape(toc, kk_pad, ic_pad)
    y3 = jnp.transpose(y3, (0, 2, 1))          # [TOC, IC_pad, KKp]
    o_ref[...] = y3[:, :ic, :kk].astype(o_ref.dtype)


def _pick_toc(oc, ic, kk_pad, x_itemsize):
    """Largest OC tile (multiple of 8) fitting the VMEM budget, keeping at
    least two grid tiles when OC >= 16 so both v7x TensorCores get work."""
    if oc < 16:
        return oc                              # single full-extent tile

    def tile_bytes(t):
        in_buf = t * kk_pad * ic * x_itemsize  # activation block
        out_buf = t * ic * 128 * 4             # output block (lane-padded est.)
        return 2 * (in_buf + out_buf)          # double-buffered

    toc = min(256, _round_up((oc + 1) // 2, 8))
    toc = max(8, toc)
    while toc > 8 and tile_bytes(toc) > _VMEM_TILE_BUDGET:
        toc -= 8
    return toc


def ftn_apply_pallas(x_slab, w1, b1, w2, b2, *, oc, kk,
                     compute_dtype=jnp.bfloat16):
    """FTN hot path.  x_slab: [OC*KKp, IC] activation slab (rows (oc, p), p
    zero-padded from KK to KKp = round_up(KK, 8)).  Returns [OC, IC, KK] f32,
    i.e. NCHW with the spatial dims flattened (reshape to 4-D is free)."""
    total_rows, ic = x_slab.shape
    kk_pad = total_rows // oc
    assert kk_pad % 8 == 0 and kk_pad >= kk, (kk_pad, kk)

    x_itemsize = jnp.dtype(compute_dtype).itemsize
    toc = _pick_toc(oc, ic, kk_pad, x_itemsize)
    tm = toc * kk_pad
    grid = (pl.cdiv(oc, toc),)

    x_slab = x_slab.astype(compute_dtype)      # activations only get bf16
    w1t = w1.T.astype(jnp.float32)             # weights/biases stay f32
    w2t = w2.T.astype(jnp.float32)
    b1r = b1.reshape(1, ic).astype(jnp.float32)
    b2r = b2.reshape(1, ic).astype(jnp.float32)

    const = lambda i: (0, 0)                   # weights resident across OC tiles
    grid_spec = pltpu.PrefetchScalarGridSpec(
        num_scalar_prefetch=0,
        grid=grid,
        in_specs=[
            pl.BlockSpec((tm, ic), lambda i: (i, 0)),   # activation tile
            pl.BlockSpec((ic, ic), const),              # w1^T
            pl.BlockSpec((1, ic), const),               # b1
            pl.BlockSpec((ic, ic), const),              # w2^T
            pl.BlockSpec((1, ic), const),               # b2
        ],
        out_specs=pl.BlockSpec((toc, ic, kk), lambda i: (i, 0, 0)),
    )

    cost = pl.CostEstimate(
        flops=4 * oc * kk * ic * ic,                     # two matmuls
        transcendentals=0,
        bytes_accessed=(oc * kk_pad * ic * x_itemsize    # activation slab
                        + 2 * ic * ic * 4 + 2 * ic * 4   # weights + biases
                        + oc * ic * kk * 4),             # output (written once)
    )

    return pl.pallas_call(
        _ftn_kernel,
        out_shape=jax.ShapeDtypeStruct((oc, ic, kk), jnp.float32),
        grid_spec=grid_spec,
        compiler_params=pltpu.CompilerParams(
            dimension_semantics=("parallel",),   # OC tiles -> 2 TCs on v7x
        ),
        cost_estimate=cost,
    )(x_slab, w1t, b1r, w2t, b2r)


class KernelsPallas:
    """JAX/Pallas port of StyleTransferFTN `Kernels`."""

    def __init__(self, in_channels, out_channels, kernel_size, stride, padding=None):
        del stride, padding  # stored by the PyTorch module but unused in forward
        key = jax.random.PRNGKey(0)
        k_w, k_b, k_f1w, k_f1b, k_f2w, k_f2b = jax.random.split(key, 6)

        # nn.Conv2d-like init, NCHW weight layout [OC, IC, K, K].
        fan_in = in_channels * kernel_size * kernel_size
        bound = 1.0 / math.sqrt(fan_in)
        self.kernel_parameters = jax.random.uniform(
            k_w, (out_channels, in_channels, kernel_size, kernel_size),
            minval=-bound, maxval=bound, dtype=jnp.float32)
        self.kernel_bias = jax.random.uniform(
            k_b, (out_channels,), minval=-bound, maxval=bound, dtype=jnp.float32)

        # Representative FTN layer: two 1x1 convs over the IC axis.
        fbound = 1.0 / math.sqrt(in_channels)
        self.ftn_w1 = jax.random.uniform(
            k_f1w, (in_channels, in_channels), minval=-fbound, maxval=fbound,
            dtype=jnp.float32)  # [c_out, c_in]
        self.ftn_b1 = jax.random.uniform(
            k_f1b, (in_channels,), minval=-fbound, maxval=fbound, dtype=jnp.float32)
        self.ftn_w2 = jax.random.uniform(
            k_f2w, (in_channels, in_channels), minval=-fbound, maxval=fbound,
            dtype=jnp.float32)  # [c_out, c_in]
        self.ftn_b2 = jax.random.uniform(
            k_f2b, (in_channels,), minval=-fbound, maxval=fbound, dtype=jnp.float32)

        # One-time layout folding: NCHW [OC, IC, K, K] -> [OC*KKp, IC] slab with
        # rows ordered (oc, p), spatial index p zero-padded to a multiple of 8,
        # IC on the lane axis.  Done once at init, not in the hot path.
        oc, ic, k, _ = self.kernel_parameters.shape
        kk = k * k
        kk_pad = max(8, _round_up(kk, 8))
        x3 = jnp.transpose(self.kernel_parameters, (0, 2, 3, 1)).reshape(oc, kk, ic)
        x3 = jnp.pad(x3, ((0, 0), (0, kk_pad - kk), (0, 0)))
        self._x_slab = x3.reshape(oc * kk_pad, ic)
        self._kk = kk

    def forward(self, ftn_layer=None, compute_dtype=jnp.bfloat16):
        if ftn_layer is not None:
            # Semantics-exact path for an arbitrary external FTN callable.
            return ftn_layer(self.kernel_parameters)
        oc, ic, k, _ = self.kernel_parameters.shape
        y = ftn_apply_pallas(self._x_slab, self.ftn_w1, self.ftn_b1,
                             self.ftn_w2, self.ftn_b2, oc=oc, kk=self._kk,
                             compute_dtype=compute_dtype)       # [OC, IC, K*K]
        # Pure metadata reshape back to NCHW -- no transpose, no extra HBM pass.
        return y.reshape(oc, ic, k, k)

    def forward_reference(self, compute_dtype=jnp.float32):
        """Pure-JAX reference of the same FTN layer (for verification)."""
        x = self.kernel_parameters.astype(compute_dtype).astype(jnp.float32)
        p = jax.lax.Precision.HIGHEST
        h = jnp.einsum("dc,nchw->ndhw", self.ftn_w1, x, precision=p) \
            + self.ftn_b1[None, :, None, None]
        h = jnp.maximum(h, 0.0)
        y = jnp.einsum("dc,nchw->ndhw", self.ftn_w2, h, precision=p) \
            + self.ftn_b2[None, :, None, None]
        return y


if __name__ == "__main__":
    # Small shape from the module: Conv2d(in=4, out=8, k=3) -> VPU path,
    # single [8, 4, 9] output block, spatial rows padded 9 -> 16.
    mod = KernelsPallas(in_channels=4, out_channels=8, kernel_size=3, stride=1)
    out_bf16 = jax.block_until_ready(mod.forward())              # bf16 slab (default)
    assert out_bf16.shape == mod.kernel_parameters.shape, (out_bf16.shape,)
    ref_bf16 = mod.forward_reference(compute_dtype=jnp.bfloat16)
    assert jnp.allclose(out_bf16, ref_bf16, atol=1e-5, rtol=1e-4), \
        "mismatch (VPU path, bf16 slab)"
    out_f32 = jax.block_until_ready(mod.forward(compute_dtype=jnp.float32))
    assert jnp.allclose(out_f32, mod.forward_reference(), atol=1e-5, rtol=1e-4), \
        "mismatch (VPU path, f32)"

    # Larger shape exercising the tiled MXU path: in=128, out=64, k=4
    # -> two [32, 128, 16] output tiles (feeds both v7x TensorCores), TM=512.
    mod2 = KernelsPallas(in_channels=128, out_channels=64, kernel_size=4, stride=1)
    out2 = jax.block_until_ready(mod2.forward())                 # bf16 slab (default)
    assert out2.shape == mod2.kernel_parameters.shape, (out2.shape,)
    ref2 = mod2.forward_reference(compute_dtype=jnp.bfloat16)
    assert jnp.allclose(out2, ref2, atol=1e-4, rtol=1e-3), \
        "mismatch (MXU path, bf16 slab)"
    out2_f32 = jax.block_until_ready(mod2.forward(compute_dtype=jnp.float32))
    assert jnp.allclose(out2_f32, mod2.forward_reference(), atol=1e-4, rtol=1e-3), \
        "mismatch (MXU path, f32)"

    print("KERNEL_OK")
</pallas_src>

<mosaic_0001>
module attributes {stable_mosaic.version = 11 : i64} {
  func.func @_ftn_kernel(%arg0: i32, %arg1: memref<128x4xbf16, #tpu.memory_space<vmem>>, %arg2: memref<4x4xf32, #tpu.memory_space<vmem>>, %arg3: memref<1x4xf32, #tpu.memory_space<vmem>>, %arg4: memref<4x4xf32, #tpu.memory_space<vmem>>, %arg5: memref<1x4xf32, #tpu.memory_space<vmem>>, %arg6: memref<8x4x9xf32, #tpu.memory_space<vmem>>) attributes {dimension_semantics = [#tpu.dimension_semantics<parallel>], iteration_bounds = array<i64: 1>, scalar_prefetch = 0 : i64, scratch_operands = 0 : i64, tpu.core_type = #tpu.core_type<tc>, window_params = [{transform_indices = @transform_0, window_bounds = array<i64: 128, 4>}, {pipeline_mode = #tpu.pipeline_mode<synchronous>, transform_indices = @transform_1, window_bounds = array<i64: 4, 4>}, {pipeline_mode = #tpu.pipeline_mode<synchronous>, transform_indices = @transform_2, window_bounds = array<i64: 1, 4>}, {pipeline_mode = #tpu.pipeline_mode<synchronous>, transform_indices = @transform_3, window_bounds = array<i64: 4, 4>}, {pipeline_mode = #tpu.pipeline_mode<synchronous>, transform_indices = @transform_4, window_bounds = array<i64: 1, 4>}, {transform_indices = @transform_5, window_bounds = array<i64: 8, 4, 9>}]} {
    %c0 = arith.constant 0 : index
    %c0_0 = arith.constant 0 : index
    %0 = vector.load %arg1[%c0, %c0_0] : memref<128x4xbf16, #tpu.memory_space<vmem>>, vector<128x4xbf16>
    %1 = arith.extf %0 : vector<128x4xbf16> to vector<128x4xf32>
    %c0_1 = arith.constant 0 : index
    %c0_2 = arith.constant 0 : index
    %2 = vector.load %arg2[%c0_1, %c0_2] : memref<4x4xf32, #tpu.memory_space<vmem>>, vector<4x4xf32>
    %c0_3 = arith.constant 0 : index
    %c0_4 = arith.constant 0 : index
    %3 = vector.load %arg4[%c0_3, %c0_4] : memref<4x4xf32, #tpu.memory_space<vmem>>, vector<4x4xf32>
    %c0_5 = arith.constant 0 : index
    %c0_6 = arith.constant 0 : index
    %4 = vector.load %arg3[%c0_5, %c0_6] : memref<1x4xf32, #tpu.memory_space<vmem>>, vector<1x4xf32>
    %c0_7 = arith.constant 0 : index
    %c0_8 = arith.constant 0 : index
    %5 = vector.load %arg5[%c0_7, %c0_8] : memref<1x4xf32, #tpu.memory_space<vmem>>, vector<1x4xf32>
    %6 = vector.shape_cast %4 : vector<1x4xf32> to vector<1x4xf32>
    %7 = vector.broadcast %6 : vector<1x4xf32> to vector<128x4xf32>
    %8 = vector.extract_strided_slice %1 {offsets = [0, 0], sizes = [128, 1], strides = [1, 1]} : vector<128x4xf32> to vector<128x1xf32>
    %9 = vector.extract_strided_slice %2 {offsets = [0, 0], sizes = [1, 4], strides = [1, 1]} : vector<4x4xf32> to vector<1x4xf32>
    %10 = vector.broadcast %8 : vector<128x1xf32> to vector<128x4xf32>
    %11 = vector.broadcast %9 : vector<1x4xf32> to vector<128x4xf32>
    %12 = arith.mulf %10, %11 : vector<128x4xf32>
    %13 = arith.addf %7, %12 : vector<128x4xf32>
    %14 = vector.extract_strided_slice %1 {offsets = [0, 1], sizes = [128, 1], strides = [1, 1]} : vector<128x4xf32> to vector<128x1xf32>
    %15 = vector.extract_strided_slice %2 {offsets = [1, 0], sizes = [1, 4], strides = [1, 1]} : vector<4x4xf32> to vector<1x4xf32>
    %16 = vector.broadcast %14 : vector<128x1xf32> to vector<128x4xf32>
    %17 = vector.broadcast %15 : vector<1x4xf32> to vector<128x4xf32>
    %18 = arith.mulf %16, %17 : vector<128x4xf32>
    %19 = arith.addf %13, %18 : vector<128x4xf32>
    %20 = vector.extract_strided_slice %1 {offsets = [0, 2], sizes = [128, 1], strides = [1, 1]} : vector<128x4xf32> to vector<128x1xf32>
    %21 = vector.extract_strided_slice %2 {offsets = [2, 0], sizes = [1, 4], strides = [1, 1]} : vector<4x4xf32> to vector<1x4xf32>
    %22 = vector.broadcast %20 : vector<128x1xf32> to vector<128x4xf32>
    %23 = vector.broadcast %21 : vector<1x4xf32> to vector<128x4xf32>
    %24 = arith.mulf %22, %23 : vector<128x4xf32>
    %25 = arith.addf %19, %24 : vector<128x4xf32>
    %26 = vector.extract_strided_slice %1 {offsets = [0, 3], sizes = [128, 1], strides = [1, 1]} : vector<128x4xf32> to vector<128x1xf32>
    %27 = vector.extract_strided_slice %2 {offsets = [3, 0], sizes = [1, 4], strides = [1, 1]} : vector<4x4xf32> to vector<1x4xf32>
    %28 = vector.broadcast %26 : vector<128x1xf32> to vector<128x4xf32>
    %29 = vector.broadcast %27 : vector<1x4xf32> to vector<128x4xf32>
    %30 = arith.mulf %28, %29 : vector<128x4xf32>
    %31 = arith.addf %25, %30 : vector<128x4xf32>
    %cst = arith.constant 0.000000e+00 : f32
    %32 = vector.broadcast %cst : f32 to vector<128x4xf32>
    %33 = arith.maximumf %31, %32 : vector<128x4xf32>
    %34 = vector.shape_cast %5 : vector<1x4xf32> to vector<1x4xf32>
    %35 = vector.broadcast %34 : vector<1x4xf32> to vector<128x4xf32>
    %36 = vector.extract_strided_slice %33 {offsets = [0, 0], sizes = [128, 1], strides = [1, 1]} : vector<128x4xf32> to vector<128x1xf32>
    %37 = vector.extract_strided_slice %3 {offsets = [0, 0], sizes = [1, 4], strides = [1, 1]} : vector<4x4xf32> to vector<1x4xf32>
    %38 = vector.broadcast %36 : vector<128x1xf32> to vector<128x4xf32>
    %39 = vector.broadcast %37 : vector<1x4xf32> to vector<128x4xf32>
    %40 = arith.mulf %38, %39 : vector<128x4xf32>
    %41 = arith.addf %35, %40 : vector<128x4xf32>
    %42 = vector.extract_strided_slice %33 {offsets = [0, 1], sizes = [128, 1], strides = [1, 1]} : vector<128x4xf32> to vector<128x1xf32>
    %43 = vector.extract_strided_slice %3 {offsets = [1, 0], sizes = [1, 4], strides = [1, 1]} : vector<4x4xf32> to vector<1x4xf32>
    %44 = vector.broadcast %42 : vector<128x1xf32> to vector<128x4xf32>
    %45 = vector.broadcast %43 : vector<1x4xf32> to vector<128x4xf32>
    %46 = arith.mulf %44, %45 : vector<128x4xf32>
    %47 = arith.addf %41, %46 : vector<128x4xf32>
    %48 = vector.extract_strided_slice %33 {offsets = [0, 2], sizes = [128, 1], strides = [1, 1]} : vector<128x4xf32> to vector<128x1xf32>
    %49 = vector.extract_strided_slice %3 {offsets = [2, 0], sizes = [1, 4], strides = [1, 1]} : vector<4x4xf32> to vector<1x4xf32>
    %50 = vector.broadcast %48 : vector<128x1xf32> to vector<128x4xf32>
    %51 = vector.broadcast %49 : vector<1x4xf32> to vector<128x4xf32>
    %52 = arith.mulf %50, %51 : vector<128x4xf32>
    %53 = arith.addf %47, %52 : vector<128x4xf32>
    %54 = vector.extract_strided_slice %33 {offsets = [0, 3], sizes = [128, 1], strides = [1, 1]} : vector<128x4xf32> to vector<128x1xf32>
    %55 = vector.extract_strided_slice %3 {offsets = [3, 0], sizes = [1, 4], strides = [1, 1]} : vector<4x4xf32> to vector<1x4xf32>
    %56 = vector.broadcast %54 : vector<128x1xf32> to vector<128x4xf32>
    %57 = vector.broadcast %55 : vector<1x4xf32> to vector<128x4xf32>
    %58 = arith.mulf %56, %57 : vector<128x4xf32>
    %59 = arith.addf %53, %58 : vector<128x4xf32>
    %c0_i32 = arith.constant 0 : i32
    %60 = arith.sitofp %c0_i32 : i32 to f32
    %61 = vector.broadcast %60 : f32 to vector<128x4xf32>
    %62 = tpu.concatenate %59, %61 in 1 : vector<128x4xf32>, vector<128x4xf32> -> vector<128x8xf32>
    %63 = vector.shape_cast %62 : vector<128x8xf32> to vector<8x16x8xf32>
    %64 = tpu.transpose %63, [0, 2, 1] : vector<8x16x8xf32> -> vector<8x8x16xf32>
    %65 = vector.extract_strided_slice %64 {offsets = [0, 0, 0], sizes = [8, 4, 9], strides = [1, 1, 1]} : vector<8x8x16xf32> to vector<8x4x9xf32>
    %c0_9 = arith.constant 0 : index
    %c0_10 = arith.constant 0 : index
    %c0_11 = arith.constant 0 : index
    %66 = vector.load %arg6[%c0_9, %c0_10, %c0_11] : memref<8x4x9xf32, #tpu.memory_space<vmem>>, vector<8x4x9xf32>
    tpu.vector_store %arg6[%c0_9, %c0_10, %c0_11], %65 {strides = array<i32>} : memref<8x4x9xf32, #tpu.memory_space<vmem>>, vector<8x4x9xf32>,
    return
  }
  func.func @transform_0(%arg0: i32) -> (i32, i32) {
    %c0_i32 = arith.constant 0 : i32
    %c0_i32_0 = arith.constant 0 : i32
    return %arg0, %c0_i32 : i32, i32
  }
  func.func @transform_1(%arg0: i32) -> (i32, i32) {
    %c0_i32 = arith.constant 0 : i32
    %c0_i32_0 = arith.constant 0 : i32
    %c0_i32_1 = arith.constant 0 : i32
    return %c0_i32, %c0_i32_0 : i32, i32
  }
  func.func @transform_2(%arg0: i32) -> (i32, i32) {
    %c0_i32 = arith.constant 0 : i32
    %c0_i32_0 = arith.constant 0 : i32
    %c0_i32_1 = arith.constant 0 : i32
    return %c0_i32, %c0_i32_0 : i32, i32
  }
  func.func @transform_3(%arg0: i32) -> (i32, i32) {
    %c0_i32 = arith.constant 0 : i32
    %c0_i32_0 = arith.constant 0 : i32
    %c0_i32_1 = arith.constant 0 : i32
    return %c0_i32, %c0_i32_0 : i32, i32
  }
  func.func @transform_4(%arg0: i32) -> (i32, i32) {
    %c0_i32 = arith.constant 0 : i32
    %c0_i32_0 = arith.constant 0 : i32
    %c0_i32_1 = arith.constant 0 : i32
    return %c0_i32, %c0_i32_0 : i32, i32
  }
  func.func @transform_5(%arg0: i32) -> (i32, i32, i32) {
    %c0_i32 = arith.constant 0 : i32
    %c0_i32_0 = arith.constant 0 : i32
    %c0_i32_1 = arith.constant 0 : i32
    return %arg0, %c0_i32, %c0_i32_0 : i32, i32, i32
  }
}

</mosaic_0001>

<llo_original>
// kernel: tpu_custom_call.1
$region0: #{tpu_custom_call.1}
  #allocation0 [shape = 'u32[]', space=smem, size = 0x4, offset = 0x4, fixed_abs, tag = 'smem constant byte address 0x4 - core index']
  #allocation1 [shape = 'u32[144,128]{1,0:T(1,128)}', space=vmem, size = 0x12000, scoped, tag = 'internal scratch']
  %s0 = inlined_call_operand.vmem [shape: bf16[128,4], index: 0, kind: input, shape index: {}]
  %s1 = inlined_call_operand.vmem [shape: f32[4,4], index: 1, kind: input, shape index: {}]
  %s2 = inlined_call_operand.vmem [shape: f32[1,4], index: 2, kind: input, shape index: {}]
  %s3 = inlined_call_operand.vmem [shape: f32[4,4], index: 3, kind: input, shape index: {}]
  %s4 = inlined_call_operand.vmem [shape: f32[1,4], index: 4, kind: input, shape index: {}]
  %s5 = inlined_call_operand.hbm [shape: f32[8,4,9], index: 5, kind: output, shape index: {}]
  %s6 = sld [smem:[#allocation0]]
  $region30: #{tpu_custom_call.1} parent=0
    _
  %s8 = ssub.s32 1, %s6
  %s9 = scalar_select 0, %s8, %s6
  $region1: #{tpu_custom_call.1} parent=0
    #allocation2 [shape = 'u8[16384]{0}', space=vmem, size = 0x4000, scoped, tag = 'output window, operand 0, single buffered']
    #allocation3 [shape = 's32[1]{0}', space=sflag, size = 0x4, scoped, tag = 'scoped memory for tpu_custom_call.1']
    %10 = vsyncpa [#allocation3], 0
    // Predicated region
    $region2: #{tpu_custom_call.1} parent=1 // pred_check
      _
    $region3: #{tpu_custom_call.1} parent=1 // pred_check_branch
      %12 = sbr.rel (0) target = $region5
    $region4: #{tpu_custom_call.1} parent=1 // pred_region
      _
    $region5: #{tpu_custom_call.1} parent=1 // pred_fallthru
      _
    // Predicated region
    $region6: #{tpu_custom_call.1} parent=1 // pred_check
      _
    $region7: #{tpu_custom_call.1} parent=1 // pred_check_branch
      %14 = sbr.rel (0) target = $region9
    $region8: #{tpu_custom_call.1} parent=1 // pred_region
      _
    $region9: #{tpu_custom_call.1} parent=1 // pred_fallthru
      _
    // Predicated region
    $region10: #{tpu_custom_call.1} parent=1 // pred_check
      _
    $region11: #{tpu_custom_call.1} parent=1 // pred_check_branch
      %16 = sbr.rel (0) target = $region13
    $region12: #{tpu_custom_call.1} parent=1 // pred_region
      _
    $region13: #{tpu_custom_call.1} parent=1 // pred_fallthru
      _
    // Predicated region
    $region14: #{tpu_custom_call.1} parent=1 // pred_check
      _
    $region15: #{tpu_custom_call.1} parent=1 // pred_check_branch
      %18 = sbr.rel (0) target = $region17
    $region16: #{tpu_custom_call.1} parent=1 // pred_region
      _
    $region17: #{tpu_custom_call.1} parent=1 // pred_fallthru
      _
    // Predicated region
    $region18: #{tpu_custom_call.1} parent=1 // pred_check
      _
    $region19: #{tpu_custom_call.1} parent=1 // pred_check_branch
      %20 = sbr.rel (0) target = $region21
    $region20: #{tpu_custom_call.1} parent=1 // pred_region
      _
    $region21: #{tpu_custom_call.1} parent=1 // pred_fallthru
      _
    %v21 = vld [vmem:[%s0] sm:$0xf]
    %v22 = vld [vmem:[%s0 + $0x4] sm:$0xf]
    %v23 = vld [vmem:[%s0 + $0x8] sm:$0xf]
    %v24 = vld [vmem:[%s0 + $0xc] sm:$0xf]
    %v25 = vld [vmem:[%s0 + $0x10] sm:$0xf]
    %v26 = vld [vmem:[%s0 + $0x14] sm:$0xf]
    %v27 = vld [vmem:[%s0 + $0x18] sm:$0xf]
    %v28 = vld [vmem:[%s0 + $0x1c] sm:$0xf]
    %v29 = vld [vmem:[%s0 + $0x20] sm:$0xf]
    %v30 = vld [vmem:[%s0 + $0x24] sm:$0xf]
    %v31 = vld [vmem:[%s0 + $0x28] sm:$0xf]
    %v32 = vld [vmem:[%s0 + $0x2c] sm:$0xf]
    %v33 = vld [vmem:[%s0 + $0x30] sm:$0xf]
    %v34 = vld [vmem:[%s0 + $0x34] sm:$0xf]
    %v35 = vld [vmem:[%s0 + $0x38] sm:$0xf]
    %v36 = vld [vmem:[%s0 + $0x3c] sm:$0xf]
    %v37 = vunpack.c.l.bf16 %v21
    %v38 = vunpack.c.l.bf16 %v22
    %v39 = vunpack.c.l.bf16 %v23
    %v40 = vunpack.c.l.bf16 %v24
    %v41 = vunpack.c.l.bf16 %v25
    %v42 = vunpack.c.l.bf16 %v26
    %v43 = vunpack.c.l.bf16 %v27
    %v44 = vunpack.c.l.bf16 %v28
    %v45 = vunpack.c.l.bf16 %v29
    %v46 = vunpack.c.l.bf16 %v30
    %v47 = vunpack.c.l.bf16 %v31
    %v48 = vunpack.c.l.bf16 %v32
    %v49 = vunpack.c.l.bf16 %v33
    %v50 = vunpack.c.l.bf16 %v34
    %v51 = vunpack.c.l.bf16 %v35
    %v52 = vunpack.c.l.bf16 %v36
    %v53 = vld [vmem:[%s1] sm:$0xf]
    %v54 = vld [vmem:[%s3] sm:$0xf]
    %v55 = vld [vmem:[%s2] sm:$0x1]
    %v56 = vld [vmem:[%s4] sm:$0x1]
    %v58 = vlaneseq
    %v59 = vshrl.u32 %v58, 7
    %v60 = vsub.s32 0, %v59
    %v61 = vrot.slane %v55, %v60
    %64 = vset.pattern.permute.xlu0 0
    %65 = vperm.xlu0 %64, %v37
    %v66 = vpop.permute.xlu0 %65
    %69 = vset.pattern.permute.xlu0 0
    %70 = vperm.xlu0 %69, %v38
    %v71 = vpop.permute.xlu0 %70
    %74 = vset.pattern.permute.xlu0 0
    %75 = vperm.xlu0 %74, %v39
    %v76 = vpop.permute.xlu0 %75
    %79 = vset.pattern.permute.xlu0 0
    %80 = vperm.xlu0 %79, %v40
    %v81 = vpop.permute.xlu0 %80
    %84 = vset.pattern.permute.xlu0 0
    %85 = vperm.xlu0 %84, %v41
    %v86 = vpop.permute.xlu0 %85
    %89 = vset.pattern.permute.xlu0 0
    %90 = vperm.xlu0 %89, %v42
    %v91 = vpop.permute.xlu0 %90
    %94 = vset.pattern.permute.xlu0 0
    %95 = vperm.xlu0 %94, %v43
    %v96 = vpop.permute.xlu0 %95
    %99 = vset.pattern.permute.xlu0 0
    %100 = vperm.xlu0 %99, %v44
    %v101 = vpop.permute.xlu0 %100
    %104 = vset.pattern.permute.xlu0 0
    %105 = vperm.xlu0 %104, %v45
    %v106 = vpop.permute.xlu0 %105
    %109 = vset.pattern.permute.xlu0 0
    %110 = vperm.xlu0 %109, %v46
    %v111 = vpop.permute.xlu0 %110
    %114 = vset.pattern.permute.xlu0 0
    %115 = vperm.xlu0 %114, %v47
    %v116 = vpop.permute.xlu0 %115
    %119 = vset.pattern.permute.xlu0 0
    %120 = vperm.xlu0 %119, %v48
    %v121 = vpop.permute.xlu0 %120
    %124 = vset.pattern.permute.xlu0 0
    %125 = vperm.xlu0 %124, %v49
    %v126 = vpop.permute.xlu0 %125
    %129 = vset.pattern.permute.xlu0 0
    %130 = vperm.xlu0 %129, %v50
    %v131 = vpop.permute.xlu0 %130
    %134 = vset.pattern.permute.xlu0 0
    %135 = vperm.xlu0 %134, %v51
    %v136 = vpop.permute.xlu0 %135
    %139 = vset.pattern.permute.xlu0 0
    %140 = vperm.xlu0 %139, %v52
    %v141 = vpop.permute.xlu0 %140
    %v143 = vlaneseq
    %v144 = vshrl.u32 %v143, 7
    %v145 = vsub.s32 0, %v144
    %v146 = vrot.slane %v53, %v145
    %v147 = vmul.f32 %v66, %v146
    %v148 = vmul.f32 %v71, %v146
    %v149 = vmul.f32 %v76, %v146
    %v150 = vmul.f32 %v81, %v146
    %v151 = vmul.f32 %v86, %v146
    %v152 = vmul.f32 %v91, %v146
    %v153 = vmul.f32 %v96, %v146
    %v154 = vmul.f32 %v101, %v146
    %v155 = vmul.f32 %v106, %v146
    %v156 = vmul.f32 %v111, %v146
    %v157 = vmul.f32 %v116, %v146
    %v158 = vmul.f32 %v121, %v146
    %v159 = vmul.f32 %v126, %v146
    %v160 = vmul.f32 %v131, %v146
    %v161 = vmul.f32 %v136, %v146
    %v162 = vmul.f32 %v141, %v146
    %v163 = vadd.f32 %v61, %v147
    %v164 = vadd.f32 %v61, %v148
    %v165 = vadd.f32 %v61, %v149
    %v166 = vadd.f32 %v61, %v150
    %v167 = vadd.f32 %v61, %v151
    %v168 = vadd.f32 %v61, %v152
    %v169 = vadd.f32 %v61, %v153
    %v170 = vadd.f32 %v61, %v154
    %v171 = vadd.f32 %v61, %v155
    %v172 = vadd.f32 %v61, %v156
    %v173 = vadd.f32 %v61, %v157
    %v174 = vadd.f32 %v61, %v158
    %v175 = vadd.f32 %v61, %v159
    %v176 = vadd.f32 %v61, %v160
    %v177 = vadd.f32 %v61, %v161
    %v178 = vadd.f32 %v61, %v162
    %179 = vset.pattern.permute.xlu0 1
    %180 = vperm.xlu0 %179, %v37
    %v181 = vpop.permute.xlu0 %180
    %183 = vset.pattern.permute.xlu0 1
    %184 = vperm.xlu0 %183, %v38
    %v185 = vpop.permute.xlu0 %184
    %187 = vset.pattern.permute.xlu0 1
    %188 = vperm.xlu0 %187, %v39
    %v189 = vpop.permute.xlu0 %188
    %191 = vset.pattern.permute.xlu0 1
    %192 = vperm.xlu0 %191, %v40
    %v193 = vpop.permute.xlu0 %192
    %195 = vset.pattern.permute.xlu0 1
    %196 = vperm.xlu0 %195, %v41
    %v197 = vpop.permute.xlu0 %196
    %199 = vset.pattern.permute.xlu0 1
    %200 = vperm.xlu0 %199, %v42
    %v201 = vpop.permute.xlu0 %200
    %203 = vset.pattern.permute.xlu0 1
    %204 = vperm.xlu0 %203, %v43
    %v205 = vpop.permute.xlu0 %204
    %207 = vset.pattern.permute.xlu0 1
    %208 = vperm.xlu0 %207, %v44
    %v209 = vpop.permute.xlu0 %208
    %211 = vset.pattern.permute.xlu0 1
    %212 = vperm.xlu0 %211, %v45
    %v213 = vpop.permute.xlu0 %212
    %215 = vset.pattern.permute.xlu0 1
    %216 = vperm.xlu0 %215, %v46
    %v217 = vpop.permute.xlu0 %216
    %219 = vset.pattern.permute.xlu0 1
    %220 = vperm.xlu0 %219, %v47
    %v221 = vpop.permute.xlu0 %220
    %223 = vset.pattern.permute.xlu0 1
    %224 = vperm.xlu0 %223, %v48
    %v225 = vpop.permute.xlu0 %224
    %227 = vset.pattern.permute.xlu0 1
    %228 = vperm.xlu0 %227, %v49
    %v229 = vpop.permute.xlu0 %228
    %231 = vset.pattern.permute.xlu0 1
    %232 = vperm.xlu0 %231, %v50
    %v233 = vpop.permute.xlu0 %232
    %235 = vset.pattern.permute.xlu0 1
    %236 = vperm.xlu0 %235, %v51
    %v237 = vpop.permute.xlu0 %236
    %239 = vset.pattern.permute.xlu0 1
    %240 = vperm.xlu0 %239, %v52
    %v241 = vpop.permute.xlu0 %240
    %v243 = vlaneseq
    %v244 = vshrl.u32 %v243, 7
    %v245 = vsub.s32 1, %v244
    %v246 = vrot.slane %v53, %v245
    %v247 = vmul.f32 %v181, %v246
    %v248 = vmul.f32 %v185, %v246
    %v249 = vmul.f32 %v189, %v246
    %v250 = vmul.f32 %v193, %v246
    %v251 = vmul.f32 %v197, %v246
    %v252 = vmul.f32 %v201, %v246
    %v253 = vmul.f32 %v205, %v246
    %v254 = vmul.f32 %v209, %v246
    %v255 = vmul.f32 %v213, %v246
    %v256 = vmul.f32 %v217, %v246
    %v257 = vmul.f32 %v221, %v246
    %v258 = vmul.f32 %v225, %v246
    %v259 = vmul.f32 %v229, %v246
    %v260 = vmul.f32 %v233, %v246
    %v261 = vmul.f32 %v237, %v246
    %v262 = vmul.f32 %v241, %v246
    %v263 = vadd.f32 %v163, %v247
    %v264 = vadd.f32 %v164, %v248
    %v265 = vadd.f32 %v165, %v249
    %v266 = vadd.f32 %v166, %v250
    %v267 = vadd.f32 %v167, %v251
    %v268 = vadd.f32 %v168, %v252
    %v269 = vadd.f32 %v169, %v253
    %v270 = vadd.f32 %v170, %v254
    %v271 = vadd.f32 %v171, %v255
    %v272 = vadd.f32 %v172, %v256
    %v273 = vadd.f32 %v173, %v257
    %v274 = vadd.f32 %v174, %v258
    %v275 = vadd.f32 %v175, %v259
    %v276 = vadd.f32 %v176, %v260
    %v277 = vadd.f32 %v177, %v261
    %v278 = vadd.f32 %v178, %v262
    %279 = vset.pattern.permute.xlu0 2
    %280 = vperm.xlu0 %279, %v37
    %v281 = vpop.permute.xlu0 %280
    %283 = vset.pattern.permute.xlu0 2
    %284 = vperm.xlu0 %283, %v38
    %v285 = vpop.permute.xlu0 %284
    %287 = vset.pattern.permute.xlu0 2
    %288 = vperm.xlu0 %287, %v39
    %v289 = vpop.permute.xlu0 %288
    %291 = vset.pattern.permute.xlu0 2
    %292 = vperm.xlu0 %291, %v40
    %v293 = vpop.permute.xlu0 %292
    %295 = vset.pattern.permute.xlu0 2
    %296 = vperm.xlu0 %295, %v41
    %v297 = vpop.permute.xlu0 %296
    %299 = vset.pattern.permute.xlu0 2
    %300 = vperm.xlu0 %299, %v42
    %v301 = vpop.permute.xlu0 %300
    %303 = vset.pattern.permute.xlu0 2
    %304 = vperm.xlu0 %303, %v43
    %v305 = vpop.permute.xlu0 %304
    %307 = vset.pattern.permute.xlu0 2
    %308 = vperm.xlu0 %307, %v44
    %v309 = vpop.permute.xlu0 %308
    %311 = vset.pattern.permute.xlu0 2
    %312 = vperm.xlu0 %311, %v45
    %v313 = vpop.permute.xlu0 %312
    %315 = vset.pattern.permute.xlu0 2
    %316 = vperm.xlu0 %315, %v46
    %v317 = vpop.permute.xlu0 %316
    %319 = vset.pattern.permute.xlu0 2
    %320 = vperm.xlu0 %319, %v47
    %v321 = vpop.permute.xlu0 %320
    %323 = vset.pattern.permute.xlu0 2
    %324 = vperm.xlu0 %323, %v48
    %v325 = vpop.permute.xlu0 %324
    %327 = vset.pattern.permute.xlu0 2
    %328 = vperm.xlu0 %327, %v49
    %v329 = vpop.permute.xlu0 %328
    %331 = vset.pattern.permute.xlu0 2
    %332 = vperm.xlu0 %331, %v50
    %v333 = vpop.permute.xlu0 %332
    %335 = vset.pattern.permute.xlu0 2
    %336 = vperm.xlu0 %335, %v51
    %v337 = vpop.permute.xlu0 %336
    %339 = vset.pattern.permute.xlu0 2
    %340 = vperm.xlu0 %339, %v52
    %v341 = vpop.permute.xlu0 %340
    %v343 = vlaneseq
    %v344 = vshrl.u32 %v343, 7
    %v345 = vsub.s32 2, %v344
    %v346 = vrot.slane %v53, %v345
    %v347 = vmul.f32 %v281, %v346
    %v348 = vmul.f32 %v285, %v346
    %v349 = vmul.f32 %v289, %v346
    %v350 = vmul.f32 %v293, %v346
    %v351 = vmul.f32 %v297, %v346
    %v352 = vmul.f32 %v301, %v346
    %v353 = vmul.f32 %v305, %v346
    %v354 = vmul.f32 %v309, %v346
    %v355 = vmul.f32 %v313, %v346
    %v356 = vmul.f32 %v317, %v346
    %v357 = vmul.f32 %v321, %v346
    %v358 = vmul.f32 %v325, %v346
    %v359 = vmul.f32 %v329, %v346
    %v360 = vmul.f32 %v333, %v346
    %v361 = vmul.f32 %v337, %v346
    %v362 = vmul.f32 %v341, %v346
    %v363 = vadd.f32 %v263, %v347
    %v364 = vadd.f32 %v264, %v348
    %v365 = vadd.f32 %v265, %v349
    %v366 = vadd.f32 %v266, %v350
    %v367 = vadd.f32 %v267, %v351
    %v368 = vadd.f32 %v268, %v352
    %v369 = vadd.f32 %v269, %v353
    %v370 = vadd.f32 %v270, %v354
    %v371 = vadd.f32 %v271, %v355
    %v372 = vadd.f32 %v272, %v356
    %v373 = vadd.f32 %v273, %v357
    %v374 = vadd.f32 %v274, %v358
    %v375 = vadd.f32 %v275, %v359
    %v376 = vadd.f32 %v276, %v360
    %v377 = vadd.f32 %v277, %v361
    %v378 = vadd.f32 %v278, %v362
    %379 = vset.pattern.permute.xlu0 3
    %380 = vperm.xlu0 %379, %v37
    %v381 = vpop.permute.xlu0 %380
    %383 = vset.pattern.permute.xlu0 3
    %384 = vperm.xlu0 %383, %v38
    %v385 = vpop.permute.xlu0 %384
    %387 = vset.pattern.permute.xlu0 3
    %388 = vperm.xlu0 %387, %v39
    %v389 = vpop.permute.xlu0 %388
    %391 = vset.pattern.permute.xlu0 3
    %392 = vperm.xlu0 %391, %v40
    %v393 = vpop.permute.xlu0 %392
    %395 = vset.pattern.permute.xlu0 3
    %396 = vperm.xlu0 %395, %v41
    %v397 = vpop.permute.xlu0 %396
    %399 = vset.pattern.permute.xlu0 3
    %400 = vperm.xlu0 %399, %v42
    %v401 = vpop.permute.xlu0 %400
    %403 = vset.pattern.permute.xlu0 3
    %404 = vperm.xlu0 %403, %v43
    %v405 = vpop.permute.xlu0 %404
    %407 = vset.pattern.permute.xlu0 3
    %408 = vperm.xlu0 %407, %v44
    %v409 = vpop.permute.xlu0 %408
    %411 = vset.pattern.permute.xlu0 3
    %412 = vperm.xlu0 %411, %v45
    %v413 = vpop.permute.xlu0 %412
    %415 = vset.pattern.permute.xlu0 3
    %416 = vperm.xlu0 %415, %v46
    %v417 = vpop.permute.xlu0 %416
    %419 = vset.pattern.permute.xlu0 3
    %420 = vperm.xlu0 %419, %v47
    %v421 = vpop.permute.xlu0 %420
    %423 = vset.pattern.permute.xlu0 3
    %424 = vperm.xlu0 %423, %v48
    %v425 = vpop.permute.xlu0 %424
    %427 = vset.pattern.permute.xlu0 3
    %428 = vperm.xlu0 %427, %v49
    %v429 = vpop.permute.xlu0 %428
    %431 = vset.pattern.permute.xlu0 3
    %432 = vperm.xlu0 %431, %v50
    %v433 = vpop.permute.xlu0 %432
    %435 = vset.pattern.permute.xlu0 3
    %436 = vperm.xlu0 %435, %v51
    %v437 = vpop.permute.xlu0 %436
    %439 = vset.pattern.permute.xlu0 3
    %440 = vperm.xlu0 %439, %v52
    %v441 = vpop.permute.xlu0 %440
    %v443 = vlaneseq
    %v444 = vshrl.u32 %v443, 7
    %v445 = vsub.s32 3, %v444
    %v446 = vrot.slane %v53, %v445
    %v447 = vmul.f32 %v381, %v446
    %v448 = vmul.f32 %v385, %v446
    %v449 = vmul.f32 %v389, %v446
    %v450 = vmul.f32 %v393, %v446
    %v451 = vmul.f32 %v397, %v446
    %v452 = vmul.f32 %v401, %v446
    %v453 = vmul.f32 %v405, %v446
    %v454 = vmul.f32 %v409, %v446
    %v455 = vmul.f32 %v413, %v446
    %v456 = vmul.f32 %v417, %v446
    %v457 = vmul.f32 %v421, %v446
    %v458 = vmul.f32 %v425, %v446
    %v459 = vmul.f32 %v429, %v446
    %v460 = vmul.f32 %v433, %v446
    %v461 = vmul.f32 %v437, %v446
    %v462 = vmul.f32 %v441, %v446
    %v463 = vadd.f32 %v363, %v447
    %v464 = vadd.f32 %v364, %v448
    %v465 = vadd.f32 %v365, %v449
    %v466 = vadd.f32 %v366, %v450
    %v467 = vadd.f32 %v367, %v451
    %v468 = vadd.f32 %v368, %v452
    %v469 = vadd.f32 %v369, %v453
    %v470 = vadd.f32 %v370, %v454
    %v471 = vadd.f32 %v371, %v455
    %v472 = vadd.f32 %v372, %v456
    %v473 = vadd.f32 %v373, %v457
    %v474 = vadd.f32 %v374, %v458
    %v475 = vadd.f32 %v375, %v459
    %v476 = vadd.f32 %v376, %v460
    %v477 = vadd.f32 %v377, %v461
    %v478 = vadd.f32 %v378, %v462
    %v479 = vmax.f32 %v463, 0.0
    %v480 = vmax.f32 %v464, 0.0
    %v481 = vmax.f32 %v465, 0.0
    %v482 = vmax.f32 %v466, 0.0
    %v483 = vmax.f32 %v467, 0.0
    %v484 = vmax.f32 %v468, 0.0
    %v485 = vmax.f32 %v469, 0.0
    %v486 = vmax.f32 %v470, 0.0
    %v487 = vmax.f32 %v471, 0.0
    %v488 = vmax.f32 %v472, 0.0
    %v489 = vmax.f32 %v473, 0.0
    %v490 = vmax.f32 %v474, 0.0
    %v491 = vmax.f32 %v475, 0.0
    %v492 = vmax.f32 %v476, 0.0
    %v493 = vmax.f32 %v477, 0.0
    %v494 = vmax.f32 %v478, 0.0
    %v496 = vlaneseq
    %v497 = vshrl.u32 %v496, 7
    %v498 = vsub.s32 0, %v497
    %v499 = vrot.slane %v56, %v498
    %502 = vset.pattern.permute.xlu0 0
    %503 = vperm.xlu0 %502, %v479
    %v504 = vpop.permute.xlu0 %503
    %507 = vset.pattern.permute.xlu0 0
    %508 = vperm.xlu0 %507, %v480
    %v509 = vpop.permute.xlu0 %508
    %512 = vset.pattern.permute.xlu0 0
    %513 = vperm.xlu0 %512, %v481
    %v514 = vpop.permute.xlu0 %513
    %517 = vset.pattern.permute.xlu0 0
    %518 = vperm.xlu0 %517, %v482
    %v519 = vpop.permute.xlu0 %518
    %522 = vset.pattern.permute.xlu0 0
    %523 = vperm.xlu0 %522, %v483
    %v524 = vpop.permute.xlu0 %523
    %527 = vset.pattern.permute.xlu0 0
    %528 = vperm.xlu0 %527, %v484
    %v529 = vpop.permute.xlu0 %528
    %532 = vset.pattern.permute.xlu0 0
    %533 = vperm.xlu0 %532, %v485
    %v534 = vpop.permute.xlu0 %533
    %537 = vset.pattern.permute.xlu0 0
    %538 = vperm.xlu0 %537, %v486
    %v539 = vpop.permute.xlu0 %538
    %542 = vset.pattern.permute.xlu0 0
    %543 = vperm.xlu0 %542, %v487
    %v544 = vpop.permute.xlu0 %543
    %547 = vset.pattern.permute.xlu0 0
    %548 = vperm.xlu0 %547, %v488
    %v549 = vpop.permute.xlu0 %548
    %552 = vset.pattern.permute.xlu0 0
    %553 = vperm.xlu0 %552, %v489
    %v554 = vpop.permute.xlu0 %553
    %557 = vset.pattern.permute.xlu0 0
    %558 = vperm.xlu0 %557, %v490
    %v559 = vpop.permute.xlu0 %558
    %562 = vset.pattern.permute.xlu0 0
    %563 = vperm.xlu0 %562, %v491
    %v564 = vpop.permute.xlu0 %563
    %567 = vset.pattern.permute.xlu0 0
    %568 = vperm.xlu0 %567, %v492
    %v569 = vpop.permute.xlu0 %568
    %572 = vset.pattern.permute.xlu0 0
    %573 = vperm.xlu0 %572, %v493
    %v574 = vpop.permute.xlu0 %573
    %577 = vset.pattern.permute.xlu0 0
    %578 = vperm.xlu0 %577, %v494
    %v579 = vpop.permute.xlu0 %578
    %v581 = vlaneseq
    %v582 = vshrl.u32 %v581, 7
    %v583 = vsub.s32 0, %v582
    %v584 = vrot.slane %v54, %v583
    %v585 = vmul.f32 %v504, %v584
    %v586 = vmul.f32 %v509, %v584
    %v587 = vmul.f32 %v514, %v584
    %v588 = vmul.f32 %v519, %v584
    %v589 = vmul.f32 %v524, %v584
    %v590 = vmul.f32 %v529, %v584
    %v591 = vmul.f32 %v534, %v584
    %v592 = vmul.f32 %v539, %v584
    %v593 = vmul.f32 %v544, %v584
    %v594 = vmul.f32 %v549, %v584
    %v595 = vmul.f32 %v554, %v584
    %v596 = vmul.f32 %v559, %v584
    %v597 = vmul.f32 %v564, %v584
    %v598 = vmul.f32 %v569, %v584
    %v599 = vmul.f32 %v574, %v584
    %v600 = vmul.f32 %v579, %v584
    %v601 = vadd.f32 %v499, %v585
    %v602 = vadd.f32 %v499, %v586
    %v603 = vadd.f32 %v499, %v587
    %v604 = vadd.f32 %v499, %v588
    %v605 = vadd.f32 %v499, %v589
    %v606 = vadd.f32 %v499, %v590
    %v607 = vadd.f32 %v499, %v591
    %v608 = vadd.f32 %v499, %v592
    %v609 = vadd.f32 %v499, %v593
    %v610 = vadd.f32 %v499, %v594
    %v611 = vadd.f32 %v499, %v595
    %v612 = vadd.f32 %v499, %v596
    %v613 = vadd.f32 %v499, %v597
    %v614 = vadd.f32 %v499, %v598
    %v615 = vadd.f32 %v499, %v599
    %v616 = vadd.f32 %v499, %v600
    %617 = vset.pattern.permute.xlu0 1
    %618 = vperm.xlu0 %617, %v479
    %v619 = vpop.permute.xlu0 %618
    %621 = vset.pattern.permute.xlu0 1
    %622 = vperm.xlu0 %621, %v480
    %v623 = vpop.permute.xlu0 %622
    %625 = vset.pattern.permute.xlu0 1
    %626 = vperm.xlu0 %625, %v481
    %v627 = vpop.permute.xlu0 %626
    %629 = vset.pattern.permute.xlu0 1
    %630 = vperm.xlu0 %629, %v482
    %v631 = vpop.permute.xlu0 %630
    %633 = vset.pattern.permute.xlu0 1
    %634 = vperm.xlu0 %633, %v483
    %v635 = vpop.permute.xlu0 %634
    %637 = vset.pattern.permute.xlu0 1
    %638 = vperm.xlu0 %637, %v484
    %v639 = vpop.permute.xlu0 %638
    %641 = vset.pattern.permute.xlu0 1
    %642 = vperm.xlu0 %641, %v485
    %v643 = vpop.permute.xlu0 %642
    %645 = vset.pattern.permute.xlu0 1
    %646 = vperm.xlu0 %645, %v486
    %v647 = vpop.permute.xlu0 %646
    %649 = vset.pattern.permute.xlu0 1
    %650 = vperm.xlu0 %649, %v487
    %v651 = vpop.permute.xlu0 %650
    %653 = vset.pattern.permute.xlu0 1
    %654 = vperm.xlu0 %653, %v488
    %v655 = vpop.permute.xlu0 %654
    %657 = vset.pattern.permute.xlu0 1
    %658 = vperm.xlu0 %657, %v489
    %v659 = vpop.permute.xlu0 %658
    %661 = vset.pattern.permute.xlu0 1
    %662 = vperm.xlu0 %661, %v490
    %v663 = vpop.permute.xlu0 %662
    %665 = vset.pattern.permute.xlu0 1
    %666 = vperm.xlu0 %665, %v491
    %v667 = vpop.permute.xlu0 %666
    %669 = vset.pattern.permute.xlu0 1
    %670 = vperm.xlu0 %669, %v492
    %v671 = vpop.permute.xlu0 %670
    %673 = vset.pattern.permute.xlu0 1
    %674 = vperm.xlu0 %673, %v493
    %v675 = vpop.permute.xlu0 %674
    %677 = vset.pattern.permute.xlu0 1
    %678 = vperm.xlu0 %677, %v494
    %v679 = vpop.permute.xlu0 %678
    %v681 = vlaneseq
    %v682 = vshrl.u32 %v681, 7
    %v683 = vsub.s32 1, %v682
    %v684 = vrot.slane %v54, %v683
    %v685 = vmul.f32 %v619, %v684
    %v686 = vmul.f32 %v623, %v684
    %v687 = vmul.f32 %v627, %v684
    %v688 = vmul.f32 %v631, %v684
    %v689 = vmul.f32 %v635, %v684
    %v690 = vmul.f32 %v639, %v684
    %v691 = vmul.f32 %v643, %v684
    %v692 = vmul.f32 %v647, %v684
    %v693 = vmul.f32 %v651, %v684
    %v694 = vmul.f32 %v655, %v684
    %v695 = vmul.f32 %v659, %v684
    %v696 = vmul.f32 %v663, %v684
    %v697 = vmul.f32 %v667, %v684
    %v698 = vmul.f32 %v671, %v684
    %v699 = vmul.f32 %v675, %v684
    %v700 = vmul.f32 %v679, %v684
    %v701 = vadd.f32 %v601, %v685
    %v702 = vadd.f32 %v602, %v686
    %v703 = vadd.f32 %v603, %v687
    %v704 = vadd.f32 %v604, %v688
    %v705 = vadd.f32 %v605, %v689
    %v706 = vadd.f32 %v606, %v690
    %v707 = vadd.f32 %v607, %v691
    %v708 = vadd.f32 %v608, %v692
    %v709 = vadd.f32 %v609, %v693
    %v710 = vadd.f32 %v610, %v694
    %v711 = vadd.f32 %v611, %v695
    %v712 = vadd.f32 %v612, %v696
    %v713 = vadd.f32 %v613, %v697
    %v714 = vadd.f32 %v614, %v698
    %v715 = vadd.f32 %v615, %v699
    %v716 = vadd.f32 %v616, %v700
    %717 = vset.pattern.permute.xlu0 2
    %718 = vperm.xlu0 %717, %v479
    %v719 = vpop.permute.xlu0 %718
    %721 = vset.pattern.permute.xlu0 2
    %722 = vperm.xlu0 %721, %v480
    %v723 = vpop.permute.xlu0 %722
    %725 = vset.pattern.permute.xlu0 2
    %726 = vperm.xlu0 %725, %v481
    %v727 = vpop.permute.xlu0 %726
    %729 = vset.pattern.permute.xlu0 2
    %730 = vperm.xlu0 %729, %v482
    %v731 = vpop.permute.xlu0 %730
    %733 = vset.pattern.permute.xlu0 2
    %734 = vperm.xlu0 %733, %v483
    %v735 = vpop.permute.xlu0 %734
    %737 = vset.pattern.permute.xlu0 2
    %738 = vperm.xlu0 %737, %v484
    %v739 = vpop.permute.xlu0 %738
    %741 = vset.pattern.permute.xlu0 2
    %742 = vperm.xlu0 %741, %v485
    %v743 = vpop.permute.xlu0 %742
    %745 = vset.pattern.permute.xlu0 2
    %746 = vperm.xlu0 %745, %v486
    %v747 = vpop.permute.xlu0 %746
    %749 = vset.pattern.permute.xlu0 2
    %750 = vperm.xlu0 %749, %v487
    %v751 = vpop.permute.xlu0 %750
    %753 = vset.pattern.permute.xlu0 2
    %754 = vperm.xlu0 %753, %v488
    %v755 = vpop.permute.xlu0 %754
    %757 = vset.pattern.permute.xlu0 2
    %758 = vperm.xlu0 %757, %v489
    %v759 = vpop.permute.xlu0 %758
    %761 = vset.pattern.permute.xlu0 2
    %762 = vperm.xlu0 %761, %v490
    %v763 = vpop.permute.xlu0 %762
    %765 = vset.pattern.permute.xlu0 2
    %766 = vperm.xlu0 %765, %v491
    %v767 = vpop.permute.xlu0 %766
    %769 = vset.pattern.permute.xlu0 2
    %770 = vperm.xlu0 %769, %v492
    %v771 = vpop.permute.xlu0 %770
    %773 = vset.pattern.permute.xlu0 2
    %774 = vperm.xlu0 %773, %v493
    %v775 = vpop.permute.xlu0 %774
    %777 = vset.pattern.permute.xlu0 2
    %778 = vperm.xlu0 %777, %v494
    %v779 = vpop.permute.xlu0 %778
    %v781 = vlaneseq
    %v782 = vshrl.u32 %v781, 7
    %v783 = vsub.s32 2, %v782
    %v784 = vrot.slane %v54, %v783
    %v785 = vmul.f32 %v719, %v784
    %v786 = vmul.f32 %v723, %v784
    %v787 = vmul.f32 %v727, %v784
    %v788 = vmul.f32 %v731, %v784
    %v789 = vmul.f32 %v735, %v784
    %v790 = vmul.f32 %v739, %v784
    %v791 = vmul.f32 %v743, %v784
    %v792 = vmul.f32 %v747, %v784
    %v793 = vmul.f32 %v751, %v784
    %v794 = vmul.f32 %v755, %v784
    %v795 = vmul.f32 %v759, %v784
    %v796 = vmul.f32 %v763, %v784
    %v797 = vmul.f32 %v767, %v784
    %v798 = vmul.f32 %v771, %v784
    %v799 = vmul.f32 %v775, %v784
    %v800 = vmul.f32 %v779, %v784
    %v801 = vadd.f32 %v701, %v785
    %v802 = vadd.f32 %v702, %v786
    %v803 = vadd.f32 %v703, %v787
    %v804 = vadd.f32 %v704, %v788
    %v805 = vadd.f32 %v705, %v789
    %v806 = vadd.f32 %v706, %v790
    %v807 = vadd.f32 %v707, %v791
    %v808 = vadd.f32 %v708, %v792
    %v809 = vadd.f32 %v709, %v793
    %v810 = vadd.f32 %v710, %v794
    %v811 = vadd.f32 %v711, %v795
    %v812 = vadd.f32 %v712, %v796
    %v813 = vadd.f32 %v713, %v797
    %v814 = vadd.f32 %v714, %v798
    %v815 = vadd.f32 %v715, %v799
    %v816 = vadd.f32 %v716, %v800
    %817 = vset.pattern.permute.xlu0 3
    %818 = vperm.xlu0 %817, %v479
    %v819 = vpop.permute.xlu0 %818
    %821 = vset.pattern.permute.xlu0 3
    %822 = vperm.xlu0 %821, %v480
    %v823 = vpop.permute.xlu0 %822
    %825 = vset.pattern.permute.xlu0 3
    %826 = vperm.xlu0 %825, %v481
    %v827 = vpop.permute.xlu0 %826
    %829 = vset.pattern.permute.xlu0 3
    %830 = vperm.xlu0 %829, %v482
    %v831 = vpop.permute.xlu0 %830
    %833 = vset.pattern.permute.xlu0 3
    %834 = vperm.xlu0 %833, %v483
    %v835 = vpop.permute.xlu0 %834
    %837 = vset.pattern.permute.xlu0 3
    %838 = vperm.xlu0 %837, %v484
    %v839 = vpop.permute.xlu0 %838
    %841 = vset.pattern.permute.xlu0 3
    %842 = vperm.xlu0 %841, %v485
    %v843 = vpop.permute.xlu0 %842
    %845 = vset.pattern.permute.xlu0 3
    %846 = vperm.xlu0 %845, %v486
    %v847 = vpop.permute.xlu0 %846
    %849 = vset.pattern.permute.xlu0 3
    %850 = vperm.xlu0 %849, %v487
    %v851 = vpop.permute.xlu0 %850
    %853 = vset.pattern.permute.xlu0 3
    %854 = vperm.xlu0 %853, %v488
    %v855 = vpop.permute.xlu0 %854
    %857 = vset.pattern.permute.xlu0 3
    %858 = vperm.xlu0 %857, %v489
    %v859 = vpop.permute.xlu0 %858
    %861 = vset.pattern.permute.xlu0 3
    %862 = vperm.xlu0 %861, %v490
    %v863 = vpop.permute.xlu0 %862
    %865 = vset.pattern.permute.xlu0 3
    %866 = vperm.xlu0 %865, %v491
    %v867 = vpop.permute.xlu0 %866
    %869 = vset.pattern.permute.xlu0 3
    %870 = vperm.xlu0 %869, %v492
    %v871 = vpop.permute.xlu0 %870
    %873 = vset.pattern.permute.xlu0 3
    %874 = vperm.xlu0 %873, %v493
    %v875 = vpop.permute.xlu0 %874
    %877 = vset.pattern.permute.xlu0 3
    %878 = vperm.xlu0 %877, %v494
    %v879 = vpop.permute.xlu0 %878
    %v881 = vlaneseq
    %v882 = vshrl.u32 %v881, 7
    %v883 = vsub.s32 3, %v882
    %v884 = vrot.slane %v54, %v883
    %v885 = vmul.f32 %v819, %v884
    %v886 = vmul.f32 %v823, %v884
    %v887 = vmul.f32 %v827, %v884
    %v888 = vmul.f32 %v831, %v884
    %v889 = vmul.f32 %v835, %v884
    %v890 = vmul.f32 %v839, %v884
    %v891 = vmul.f32 %v843, %v884
    %v892 = vmul.f32 %v847, %v884
    %v893 = vmul.f32 %v851, %v884
    %v894 = vmul.f32 %v855, %v884
    %v895 = vmul.f32 %v859, %v884
    %v896 = vmul.f32 %v863, %v884
    %v897 = vmul.f32 %v867, %v884
    %v898 = vmul.f32 %v871, %v884
    %v899 = vmul.f32 %v875, %v884
    %v900 = vmul.f32 %v879, %v884
    %v901 = vadd.f32 %v801, %v885
    %v902 = vadd.f32 %v802, %v886
    %v903 = vadd.f32 %v803, %v887
    %v904 = vadd.f32 %v804, %v888
    %v905 = vadd.f32 %v805, %v889
    %v906 = vadd.f32 %v806, %v890
    %v907 = vadd.f32 %v807, %v891
    %v908 = vadd.f32 %v808, %v892
    %v909 = vadd.f32 %v809, %v893
    %v910 = vadd.f32 %v810, %v894
    %v911 = vadd.f32 %v811, %v895
    %v912 = vadd.f32 %v812, %v896
    %v913 = vadd.f32 %v813, %v897
    %v914 = vadd.f32 %v814, %v898
    %v915 = vadd.f32 %v815, %v899
    %v916 = vadd.f32 %v816, %v900
    %vm917 = vcmask 31744
    %v918 = vsel %vm917, %v901, 0.0
    %v919 = vsel %vm917, %v902, 0.0
    %v920 = vsel %vm917, %v903, 0.0
    %v921 = vsel %vm917, %v904, 0.0
    %v922 = vsel %vm917, %v905, 0.0
    %v923 = vsel %vm917, %v906, 0.0
    %v924 = vsel %vm917, %v907, 0.0
    %v925 = vsel %vm917, %v908, 0.0
    %v926 = vsel %vm917, %v909, 0.0
    %v927 = vsel %vm917, %v910, 0.0
    %v928 = vsel %vm917, %v911, 0.0
    %v929 = vsel %vm917, %v912, 0.0
    %v930 = vsel %vm917, %v913, 0.0
    %v931 = vsel %vm917, %v914, 0.0
    %v932 = vsel %vm917, %v915, 0.0
    %v933 = vsel %vm917, %v916, 0.0
    %934 = vxpose.xlu0.b32.start [1/16] %v918, 128
    %935 = vxpose.xlu0.b32.cont [2/16] %v919, 128
    %936 = vxpose.xlu0.b32.cont [3/16] 0.0, 128
    %937 = vxpose.xlu0.b32.cont [4/16] 0.0, 128
    %938 = vxpose.xlu0.b32.cont [5/16] 0.0, 128
    %939 = vxpose.xlu0.b32.cont [6/16] 0.0, 128
    %940 = vxpose.xlu0.b32.cont [7/16] 0.0, 128
    %941 = vxpose.xlu0.b32.cont [8/16] 0.0, 128
    %942 = vxpose.xlu0.b32.cont [9/16] 0.0, 128
    %943 = vxpose.xlu0.b32.cont [10/16] 0.0, 128
    %944 = vxpose.xlu0.b32.cont [11/16] 0.0, 128
    %945 = vxpose.xlu0.b32.cont [12/16] 0.0, 128
    %946 = vxpose.xlu0.b32.cont [13/16] 0.0, 128
    %947 = vxpose.xlu0.b32.cont [14/16] 0.0, 128
    %948 = vxpose.xlu0.b32.cont [15/16] 0.0, 128
    %949 = vxpose.xlu0.b32.end [16/16] 0.0, 128
    %v950 = vpop.trf.xlu0
    %v951 = vpop.trf.xlu0
    %v952 = vpop.trf.xlu0
    %v953 = vpop.trf.xlu0
    %v954 = vpop.trf.xlu0
    %v955 = vpop.trf.xlu0
    %v956 = vpop.trf.xlu0
    %v957 = vpop.trf.xlu0
    %v958 = vpop.trf.xlu0
    %v959 = vpop.trf.xlu0
    %v960 = vpop.trf.xlu0
    %v961 = vpop.trf.xlu0
    %v962 = vpop.trf.xlu0
    %v963 = vpop.trf.xlu0
    %v964 = vpop.trf.xlu0
    %v965 = vpop.trf.xlu0
    %966 = vxpose.xlu0.b32.start [1/16] %v920, 128
    %967 = vxpose.xlu0.b32.cont [2/16] %v921, 128
    %968 = vxpose.xlu0.b32.cont [3/16] 0.0, 128
    %969 = vxpose.xlu0.b32.cont [4/16] 0.0, 128
    %970 = vxpose.xlu0.b32.cont [5/16] 0.0, 128
    %971 = vxpose.xlu0.b32.cont [6/16] 0.0, 128
    %972 = vxpose.xlu0.b32.cont [7/16] 0.0, 128
    %973 = vxpose.xlu0.b32.cont [8/16] 0.0, 128
    %974 = vxpose.xlu0.b32.cont [9/16] 0.0, 128
    %975 = vxpose.xlu0.b32.cont [10/16] 0.0, 128
    %976 = vxpose.xlu0.b32.cont [11/16] 0.0, 128
    %977 = vxpose.xlu0.b32.cont [12/16] 0.0, 128
    %978 = vxpose.xlu0.b32.cont [13/16] 0.0, 128
    %979 = vxpose.xlu0.b32.cont [14/16] 0.0, 128
    %980 = vxpose.xlu0.b32.cont [15/16] 0.0, 128
    %981 = vxpose.xlu0.b32.end [16/16] 0.0, 128
    %v982 = vpop.trf.xlu0
    %v983 = vpop.trf.xlu0
    %v984 = vpop.trf.xlu0
    %v985 = vpop.trf.xlu0
    %v986 = vpop.trf.xlu0
    %v987 = vpop.trf.xlu0
    %v988 = vpop.trf.xlu0
    %v989 = vpop.trf.xlu0
    %v990 = vpop.trf.xlu0
    %v991 = vpop.trf.xlu0
    %v992 = vpop.trf.xlu0
    %v993 = vpop.trf.xlu0
    %v994 = vpop.trf.xlu0
    %v995 = vpop.trf.xlu0
    %v996 = vpop.trf.xlu0
    %v997 = vpop.trf.xlu0
    %998 = vxpose.xlu0.b32.start [1/16] %v922, 128
    %999 = vxpose.xlu0.b32.cont [2/16] %v923, 128
    %1000 = vxpose.xlu0.b32.cont [3/16] 0.0, 128
    %1001 = vxpose.xlu0.b32.cont [4/16] 0.0, 128
    %1002 = vxpose.xlu0.b32.cont [5/16] 0.0, 128
    %1003 = vxpose.xlu0.b32.cont [6/16] 0.0, 128
    %1004 = vxpose.xlu0.b32.cont [7/16] 0.0, 128
    %1005 = vxpose.xlu0.b32.cont [8/16] 0.0, 128
    %1006 = vxpose.xlu0.b32.cont [9/16] 0.0, 128
    %1007 = vxpose.xlu0.b32.cont [10/16] 0.0, 128
    %1008 = vxpose.xlu0.b32.cont [11/16] 0.0, 128
    %1009 = vxpose.xlu0.b32.cont [12/16] 0.0, 128
    %1010 = vxpose.xlu0.b32.cont [13/16] 0.0, 128
    %1011 = vxpose.xlu0.b32.cont [14/16] 0.0, 128
    %1012 = vxpose.xlu0.b32.cont [15/16] 0.0, 128
    %1013 = vxpose.xlu0.b32.end [16/16] 0.0, 128
    %v1014 = vpop.trf.xlu0
    %v1015 = vpop.trf.xlu0
    %v1016 = vpop.trf.xlu0
    %v1017 = vpop.trf.xlu0
    %v1018 = vpop.trf.xlu0
    %v1019 = vpop.trf.xlu0
    %v1020 = vpop.trf.xlu0
    %v1021 = vpop.trf.xlu0
    %v1022 = vpop.trf.xlu0
    %v1023 = vpop.trf.xlu0
    %v1024 = vpop.trf.xlu0
    %v1025 = vpop.trf.xlu0
    %v1026 = vpop.trf.xlu0
    %v1027 = vpop.trf.xlu0
    %v1028 = vpop.trf.xlu0
    %v1029 = vpop.trf.xlu0
    %1030 = vxpose.xlu0.b32.start [1/16] %v924, 128
    %1031 = vxpose.xlu0.b32.cont [2/16] %v925, 128
    %1032 = vxpose.xlu0.b32.cont [3/16] 0.0, 128
    %1033 = vxpose.xlu0.b32.cont [4/16] 0.0, 128
    %1034 = vxpose.xlu0.b32.cont [5/16] 0.0, 128
    %1035 = vxpose.xlu0.b32.cont [6/16] 0.0, 128
    %1036 = vxpose.xlu0.b32.cont [7/16] 0.0, 128
    %1037 = vxpose.xlu0.b32.cont [8/16] 0.0, 128
    %1038 = vxpose.xlu0.b32.cont [9/16] 0.0, 128
    %1039 = vxpose.xlu0.b32.cont [10/16] 0.0, 128
    %1040 = vxpose.xlu0.b32.cont [11/16] 0.0, 128
    %1041 = vxpose.xlu0.b32.cont [12/16] 0.0, 128
    %1042 = vxpose.xlu0.b32.cont [13/16] 0.0, 128
    %1043 = vxpose.xlu0.b32.cont [14/16] 0.0, 128
    %1044 = vxpose.xlu0.b32.cont [15/16] 0.0, 128
    %1045 = vxpose.xlu0.b32.end [16/16] 0.0, 128
    %v1046 = vpop.trf.xlu0
    %v1047 = vpop.trf.xlu0
    %v1048 = vpop.trf.xlu0
    %v1049 = vpop.trf.xlu0
    %v1050 = vpop.trf.xlu0
    %v1051 = vpop.trf.xlu0
    %v1052 = vpop.trf.xlu0
    %v1053 = vpop.trf.xlu0
    %v1054 = vpop.trf.xlu0
    %v1055 = vpop.trf.xlu0
    %v1056 = vpop.trf.xlu0
    %v1057 = vpop.trf.xlu0
    %v1058 = vpop.trf.xlu0
    %v1059 = vpop.trf.xlu0
    %v1060 = vpop.trf.xlu0
    %v1061 = vpop.trf.xlu0
    %1062 = vxpose.xlu0.b32.start [1/16] %v926, 128
    %1063 = vxpose.xlu0.b32.cont [2/16] %v927, 128
    %1064 = vxpose.xlu0.b32.cont [3/16] 0.0, 128
    %1065 = vxpose.xlu0.b32.cont [4/16] 0.0, 128
    %1066 = vxpose.xlu0.b32.cont [5/16] 0.0, 128
    %1067 = vxpose.xlu0.b32.cont [6/16] 0.0, 128
    %1068 = vxpose.xlu0.b32.cont [7/16] 0.0, 128
    %1069 = vxpose.xlu0.b32.cont [8/16] 0.0, 128
    %1070 = vxpose.xlu0.b32.cont [9/16] 0.0, 128
    %1071 = vxpose.xlu0.b32.cont [10/16] 0.0, 128
    %1072 = vxpose.xlu0.b32.cont [11/16] 0.0, 128
    %1073 = vxpose.xlu0.b32.cont [12/16] 0.0, 128
    %1074 = vxpose.xlu0.b32.cont [13/16] 0.0, 128
    %1075 = vxpose.xlu0.b32.cont [14/16] 0.0, 128
    %1076 = vxpose.xlu0.b32.cont [15/16] 0.0, 128
    %1077 = vxpose.xlu0.b32.end [16/16] 0.0, 128
    %v1078 = vpop.trf.xlu0
    %v1079 = vpop.trf.xlu0
    %v1080 = vpop.trf.xlu0
    %v1081 = vpop.trf.xlu0
    %v1082 = vpop.trf.xlu0
    %v1083 = vpop.trf.xlu0
    %v1084 = vpop.trf.xlu0
    %v1085 = vpop.trf.xlu0
    %v1086 = vpop.trf.xlu0
    %v1087 = vpop.trf.xlu0
    %v1088 = vpop.trf.xlu0
    %v1089 = vpop.trf.xlu0
    %v1090 = vpop.trf.xlu0
    %v1091 = vpop.trf.xlu0
    %v1092 = vpop.trf.xlu0
    %v1093 = vpop.trf.xlu0
    %1094 = vxpose.xlu0.b32.start [1/16] %v928, 128
    %1095 = vxpose.xlu0.b32.cont [2/16] %v929, 128
    %1096 = vxpose.xlu0.b32.cont [3/16] 0.0, 128
    %1097 = vxpose.xlu0.b32.cont [4/16] 0.0, 128
    %1098 = vxpose.xlu0.b32.cont [5/16] 0.0, 128
    %1099 = vxpose.xlu0.b32.cont [6/16] 0.0, 128
    %1100 = vxpose.xlu0.b32.cont [7/16] 0.0, 128
    %1101 = vxpose.xlu0.b32.cont [8/16] 0.0, 128
    %1102 = vxpose.xlu0.b32.cont [9/16] 0.0, 128
    %1103 = vxpose.xlu0.b32.cont [10/16] 0.0, 128
    %1104 = vxpose.xlu0.b32.cont [11/16] 0.0, 128
    %1105 = vxpose.xlu0.b32.cont [12/16] 0.0, 128
    %1106 = vxpose.xlu0.b32.cont [13/16] 0.0, 128
    %1107 = vxpose.xlu0.b32.cont [14/16] 0.0, 128
    %1108 = vxpose.xlu0.b32.cont [15/16] 0.0, 128
    %1109 = vxpose.xlu0.b32.end [16/16] 0.0, 128
    %v1110 = vpop.trf.xlu0
    %v1111 = vpop.trf.xlu0
    %v1112 = vpop.trf.xlu0
    %v1113 = vpop.trf.xlu0
    %v1114 = vpop.trf.xlu0
    %v1115 = vpop.trf.xlu0
    %v1116 = vpop.trf.xlu0
    %v1117 = vpop.trf.xlu0
    %v1118 = vpop.trf.xlu0
    %v1119 = vpop.trf.xlu0
    %v1120 = vpop.trf.xlu0
    %v1121 = vpop.trf.xlu0
    %v1122 = vpop.trf.xlu0
    %v1123 = vpop.trf.xlu0
    %v1124 = vpop.trf.xlu0
    %v1125 = vpop.trf.xlu0
    %1126 = vxpose.xlu0.b32.start [1/16] %v930, 128
    %1127 = vxpose.xlu0.b32.cont [2/16] %v931, 128
    %1128 = vxpose.xlu0.b32.cont [3/16] 0.0, 128
    %1129 = vxpose.xlu0.b32.cont [4/16] 0.0, 128
    %1130 = vxpose.xlu0.b32.cont [5/16] 0.0, 128
    %1131 = vxpose.xlu0.b32.cont [6/16] 0.0, 128
    %1132 = vxpose.xlu0.b32.cont [7/16] 0.0, 128
    %1133 = vxpose.xlu0.b32.cont [8/16] 0.0, 128
    %1134 = vxpose.xlu0.b32.cont [9/16] 0.0, 128
    %1135 = vxpose.xlu0.b32.cont [10/16] 0.0, 128
    %1136 = vxpose.xlu0.b32.cont [11/16] 0.0, 128
    %1137 = vxpose.xlu0.b32.cont [12/16] 0.0, 128
    %1138 = vxpose.xlu0.b32.cont [13/16] 0.0, 128
    %1139 = vxpose.xlu0.b32.cont [14/16] 0.0, 128
    %1140 = vxpose.xlu0.b32.cont [15/16] 0.0, 128
    %1141 = vxpose.xlu0.b32.end [16/16] 0.0, 128
    %v1142 = vpop.trf.xlu0
    %v1143 = vpop.trf.xlu0
    %v1144 = vpop.trf.xlu0
    %v1145 = vpop.trf.xlu0
    %v1146 = vpop.trf.xlu0
    %v1147 = vpop.trf.xlu0
    %v1148 = vpop.trf.xlu0
    %v1149 = vpop.trf.xlu0
    %v1150 = vpop.trf.xlu0
    %v1151 = vpop.trf.xlu0
    %v1152 = vpop.trf.xlu0
    %v1153 = vpop.trf.xlu0
    %v1154 = vpop.trf.xlu0
    %v1155 = vpop.trf.xlu0
    %v1156 = vpop.trf.xlu0
    %v1157 = vpop.trf.xlu0
    %1158 = vxpose.xlu0.b32.start [1/16] %v932, 128
    %1159 = vxpose.xlu0.b32.cont [2/16] %v933, 128
    %1160 = vxpose.xlu0.b32.cont [3/16] 0.0, 128
    %1161 = vxpose.xlu0.b32.cont [4/16] 0.0, 128
    %1162 = vxpose.xlu0.b32.cont [5/16] 0.0, 128
    %1163 = vxpose.xlu0.b32.cont [6/16] 0.0, 128
    %1164 = vxpose.xlu0.b32.cont [7/16] 0.0, 128
    %1165 = vxpose.xlu0.b32.cont [8/16] 0.0, 128
    %1166 = vxpose.xlu0.b32.cont [9/16] 0.0, 128
    %1167 = vxpose.xlu0.b32.cont [10/16] 0.0, 128
    %1168 = vxpose.xlu0.b32.cont [11/16] 0.0, 128
    %1169 = vxpose.xlu0.b32.cont [12/16] 0.0, 128
    %1170 = vxpose.xlu0.b32.cont [13/16] 0.0, 128
    %1171 = vxpose.xlu0.b32.cont [14/16] 0.0, 128
    %1172 = vxpose.xlu0.b32.cont [15/16] 0.0, 128
    %1173 = vxpose.xlu0.b32.end [16/16] 0.0, 128
    %v1174 = vpop.trf.xlu0
    %v1175 = vpop.trf.xlu0
    %v1176 = vpop.trf.xlu0
    %v1177 = vpop.trf.xlu0
    %v1178 = vpop.trf.xlu0
    %v1179 = vpop.trf.xlu0
    %v1180 = vpop.trf.xlu0
    %v1181 = vpop.trf.xlu0
    %v1182 = vpop.trf.xlu0
    %v1183 = vpop.trf.xlu0
    %v1184 = vpop.trf.xlu0
    %v1185 = vpop.trf.xlu0
    %v1186 = vpop.trf.xlu0
    %v1187 = vpop.trf.xlu0
    %v1188 = vpop.trf.xlu0
    %v1189 = vpop.trf.xlu0
    %vm1190 = vcmask 68608
    %1191 = vst.msk [vmem:[#allocation2] sm:$0xf] %vm1190, %v950
    %1192 = vst.msk [vmem:[#allocation2 + $0x4] sm:$0xf] %vm1190, %v982
    %1193 = vst.msk [vmem:[#allocation2 + $0x8] sm:$0xf] %vm1190, %v1014
    %1194 = vst.msk [vmem:[#allocation2 + $0xc] sm:$0xf] %vm1190, %v1046
    %1195 = vst.msk [vmem:[#allocation2 + $0x10] sm:$0xf] %vm1190, %v1078
    %1196 = vst.msk [vmem:[#allocation2 + $0x14] sm:$0xf] %vm1190, %v1110
    %1197 = vst.msk [vmem:[#allocation2 + $0x18] sm:$0xf] %vm1190, %v1142
    %1198 = vst.msk [vmem:[#allocation2 + $0x1c] sm:$0xf] %vm1190, %v1174
    // Predicated region
    $region22: #{tpu_custom_call.1} parent=1 // pred_check
      _
    $region23: #{tpu_custom_call.1} parent=1 // pred_check_branch
      %1200 = sbr.rel (0) target = $region25
    $region24: #{tpu_custom_call.1} parent=1 // pred_region
      %s1202 = ssub.s32 512, 512
      %1203 = vsyncadd [#allocation3], %s1202
      %s1204 = sshll.u32 [#allocation2], 4
      %s1205 = int_to_ptr.vmem [resolvable:$true] %s1204
      %1210 = dma.vmem_to_hbm [thread:$0]  %s1205, 512, %s5, [#allocation3], 64, 64, 4
    $region25: #{tpu_custom_call.1} parent=1 // pred_fallthru
      _
    // Predicated region
    $region26: #{tpu_custom_call.1} parent=1 // pred_check
      _
    $region27: #{tpu_custom_call.1} parent=1 // pred_check_branch
      %1212 = sbr.rel (0) target = $region29
    $region28: #{tpu_custom_call.1} parent=1 // pred_region
      %1213 = dma.done [#allocation3], 512
    $region29: #{tpu_custom_call.1} parent=1 // pred_fallthru
      _
    %1214 = vsyncpa [#allocation3], 1

</llo_original>
